<compile_context>
chip_gen: v7x
topology: tpu7x:2x2x1
jax: 0.10.0
libtpu: 0.0.40
codegen_flags: <defaults>
</compile_context>

<pallas_src>
import functools

import jax
import jax.numpy as jnp
from jax.experimental import pallas as pl
from jax.experimental.pallas import tpu as pltpu

_LANE = 128          # lane multiple for feature dims (use 256 on v6e/v7x for
                     # wide hidden layers; 128 is right for the small dims here)
_SUBLANE = 8
_BATCH_TILE = 256    # batch tile when the gridded path is used
_GRID_BATCH_MIN = 512  # switch to the batch grid at/above this many rows


def _round_up(x, m):
    return ((x + m - 1) // m) * m


# ---------------------------------------------------------------------------
# Fused MLP kernel
# ---------------------------------------------------------------------------
def _mlp_kernel(*refs, n_layers, softmax, n_valid_out):
    """refs = (x_ref, w0, b0, w1, b1, ..., o_ref).

    Computes relu(x @ w0 + b0) -> ... -> (x @ w_last + b_last) with optional
    masked log_softmax on the final (padded) layer.  Matmul operands are
    bf16, accumulation and the epilogue are f32.
    """
    x_ref, o_ref = refs[0], refs[-1]
    wb = refs[1:-1]

    h = x_ref[...]                                   # bf16 (rows, in_pad)
    for li in range(n_layers):
        w = wb[2 * li][...]                          # bf16 (K_pad, N_pad)
        b = wb[2 * li + 1][...]                      # f32  (1, N_pad) — free VPU bcast
        z = jnp.dot(h, w, preferred_element_type=jnp.float32) + b
        if li < n_layers - 1:
            h = jnp.maximum(z, 0.0).astype(jnp.bfloat16)   # next MXU operand
        else:
            if softmax:
                if n_valid_out != z.shape[-1]:
                    # Mask padded lanes so the log_softmax normalizer is exact.
                    lane = jax.lax.broadcasted_iota(jnp.int32, z.shape, 1)
                    z = jnp.where(lane < n_valid_out, z, -jnp.inf)
                m = jnp.max(z, axis=-1, keepdims=True)
                s = z - m
                lse = jnp.log(jnp.sum(jnp.exp(s), axis=-1, keepdims=True))
                z = s - lse
            h = z
    o_ref[...] = h.astype(o_ref.dtype)


# ---------------------------------------------------------------------------
# One-time parameter preparation (padding / casting hoisted out of forward)
# ---------------------------------------------------------------------------
def prepare_mlp_params(params, lane_multiple=_LANE):
    """Pad feature dims to `lane_multiple`, cast weights to bf16, biases to
    f32 (1, N_pad).  Call ONCE; reuse the result for every forward call."""
    common = [params["in_layer"]] + list(params["hidden"])
    in_dim = common[0][0].shape[0]
    dims = [in_dim] + [w.shape[1] for (w, _) in common]
    dims_pad = [_round_up(d, lane_multiple) for d in dims]

    def pad_layer(w, b, kp, np_):
        w = jnp.asarray(w, jnp.float32)
        b = jnp.asarray(b, jnp.float32).reshape(1, -1)
        w_p = jnp.pad(w, ((0, kp - w.shape[0]), (0, np_ - w.shape[1])))
        b_p = jnp.pad(b, ((0, 0), (0, np_ - b.shape[1])))
        return w_p.astype(jnp.bfloat16), b_p

    common_p = [pad_layer(w, b, dims_pad[i], dims_pad[i + 1])
                for i, (w, b) in enumerate(common)]

    hid_last_pad = dims_pad[-1]
    out_p, out_dims = [], []
    for (w, b) in params["out"]:
        n_out = w.shape[1]
        n_out_pad = _round_up(n_out, lane_multiple)
        out_p.append(pad_layer(w, b, hid_last_pad, n_out_pad))
        out_dims.append((n_out, n_out_pad))

    return {
        "common": common_p,          # [(w_bf16, b_f32), ...] in_layer + hidden
        "out": out_p,                # per-session out layers, padded
        "dims": dims,                # logical feature dims of the common part
        "dims_pad": dims_pad,
        "out_dims": out_dims,        # (n_out, n_out_pad) per out layer
    }


# ---------------------------------------------------------------------------
# Fused forward (mirrors mlp.forward)
# ---------------------------------------------------------------------------
def mlp_forward(prepared, x, sess_id=0, id_per_sess=None, softmax=False):
    # out-layer selection (Python-level glue, like np.where in torch version)
    n_out_layers = len(prepared["out"])
    if id_per_sess is None:
        id_per_sess = list(range(n_out_layers))
    if len(id_per_sess) > 1:
        out_layer_idx = int(list(id_per_sess).index(sess_id))
    else:
        out_layer_idx = 0

    x = x.reshape(x.shape[0], -1)                    # x.flatten(1)
    B, in_dim = x.shape
    assert in_dim == prepared["dims"][0], "input dim mismatch"

    layers = list(prepared["common"]) + [prepared["out"][out_layer_idx]]
    dims = prepared["dims"] + [prepared["out_dims"][out_layer_idx][0]]
    dims_pad = prepared["dims_pad"] + [prepared["out_dims"][out_layer_idx][1]]
    n_out, n_out_pad = dims[-1], dims_pad[-1]
    n_layers = len(layers)

    use_grid = B >= _GRID_BATCH_MIN
    if use_grid:
        tb = _BATCH_TILE
        B_pad = _round_up(B, tb)
    else:
        tb = None
        B_pad = _round_up(max(B, 1), _SUBLANE)

    # Per-call host-side prep is only the activation pad/cast.
    x_p = x.astype(jnp.bfloat16)
    if B_pad != B or dims_pad[0] != in_dim:
        x_p = jnp.pad(x_p, ((0, B_pad - B), (0, dims_pad[0] - in_dim)))

    flat = []
    for (w, b) in layers:
        flat += [w, b]

    kernel = functools.partial(
        _mlp_kernel, n_layers=n_layers, softmax=softmax, n_valid_out=n_out)

    # Logical (unpadded) cost estimate — advisory only.
    flops = sum(2 * B * dims[i] * dims[i + 1] for i in range(n_layers))
    bytes_accessed = (2 * B * in_dim
                      + sum(2 * dims[i] * dims[i + 1] + 4 * dims[i + 1]
                            for i in range(n_layers))
                      + 4 * B * n_out)
    transcendentals = B * n_out if softmax else 0
    cost = pl.CostEstimate(flops=flops, transcendentals=transcendentals,
                           bytes_accessed=bytes_accessed)

    # VMEM budget: padded operands (double-buffered batch tiles when gridded)
    # plus headroom, capped at 64 MiB so the limit is valid on v7x.
    wb_bytes = sum(int(a.size) * a.dtype.itemsize for a in flat)
    if use_grid:
        act_bytes = 2 * (tb * dims_pad[0] * 2 + tb * n_out_pad * 4)
        h_bytes = 2 * tb * max(dims_pad) * 4
    else:
        act_bytes = B_pad * dims_pad[0] * 2 + B_pad * n_out_pad * 4
        h_bytes = 2 * B_pad * max(dims_pad) * 4
    vmem_need = int(1.25 * (2 * wb_bytes + act_bytes + h_bytes)) + (1 << 20)
    vmem_limit = min(max(vmem_need, 32 * 1024 * 1024), 64 * 1024 * 1024)

    if not use_grid:
        # Tiny batch: grid-less, every operand a whole-array VMEM block.
        vmem_spec = pl.BlockSpec(memory_space=pltpu.MemorySpace.VMEM)
        out = pl.pallas_call(
            kernel,
            out_shape=jax.ShapeDtypeStruct((B_pad, n_out_pad), jnp.float32),
            in_specs=[vmem_spec] * (1 + len(flat)),
            out_specs=vmem_spec,
            cost_estimate=cost,
            compiler_params=pltpu.CompilerParams(vmem_limit_bytes=vmem_limit),
        )(x_p, *flat)
    else:
        # Large batch: tile the batch, weights resident across the grid axis,
        # "parallel" so both v7x TensorCores split the work and x/out DMAs
        # pipeline behind the previous tile's matmuls.
        grid = (B_pad // tb,)
        in_specs = [pl.BlockSpec((tb, dims_pad[0]), lambda i: (i, 0))]
        for li in range(n_layers):
            kp, np_ = dims_pad[li], dims_pad[li + 1]
            in_specs.append(pl.BlockSpec((kp, np_), lambda i: (0, 0)))
            in_specs.append(pl.BlockSpec((1, np_), lambda i: (0, 0)))
        out_specs = pl.BlockSpec((tb, n_out_pad), lambda i: (i, 0))
        out = pl.pallas_call(
            kernel,
            out_shape=jax.ShapeDtypeStruct((B_pad, n_out_pad), jnp.float32),
            grid=grid,
            in_specs=in_specs,
            out_specs=out_specs,
            cost_estimate=cost,
            compiler_params=pltpu.CompilerParams(
                dimension_semantics=("parallel",),
                vmem_limit_bytes=vmem_limit),
        )(x_p, *flat)

    if B_pad == B and n_out_pad == n_out:
        return out                      # no trailing slice dispatch needed
    return out[:B, :n_out]


# ---------------------------------------------------------------------------
# Parameter construction (deterministic, PyTorch-Linear-style uniform init)
# ---------------------------------------------------------------------------
def init_mlp_params(key, in_dim, hid_features, output_dim_per_session):
    if not hasattr(hid_features, "__iter__"):
        hid_features = [hid_features]
    if not hasattr(output_dim_per_session, "__iter__"):
        output_dim_per_session = [output_dim_per_session]

    def linear_init(k, fan_in, fan_out):
        kw, kb = jax.random.split(k)
        bound = 1.0 / jnp.sqrt(fan_in)
        w = jax.random.uniform(kw, (fan_in, fan_out), jnp.float32, -bound, bound)
        b = jax.random.uniform(kb, (fan_out,), jnp.float32, -bound, bound)
        return w, b

    n_keys = 1 + (len(hid_features) - 1) + len(output_dim_per_session)
    keys = jax.random.split(key, n_keys)
    ki = iter(range(len(keys)))

    params = {}
    params["in_layer"] = linear_init(keys[next(ki)], in_dim, hid_features[0])
    params["hidden"] = [
        linear_init(keys[next(ki)], hid_features[i], hid_features[i + 1])
        for i in range(len(hid_features) - 1)
    ]
    params["out"] = [
        linear_init(keys[next(ki)], hid_features[-1], out_f)
        for out_f in output_dim_per_session
    ]
    return params


# ---------------------------------------------------------------------------
# References (plain JAX) for sanity checking
# ---------------------------------------------------------------------------
def mlp_forward_ref(params, x, sess_id=0, id_per_sess=None, softmax=False):
    """Full-f32 reference — matches the torch module's math exactly."""
    if id_per_sess is None:
        id_per_sess = list(range(len(params["out"])))
    out_idx = int(list(id_per_sess).index(sess_id)) if len(id_per_sess) > 1 else 0
    x = x.reshape(x.shape[0], -1).astype(jnp.float32)
    w, b = params["in_layer"]
    x = jax.nn.relu(x @ w + b)
    for (w, b) in params["hidden"]:
        x = jax.nn.relu(x @ w + b)
    w, b = params["out"][out_idx]
    z = x @ w + b
    return jax.nn.log_softmax(z, axis=-1) if softmax else z


def mlp_forward_ref_bf16(params, x, sess_id=0, id_per_sess=None, softmax=False):
    """Reference with the same bf16-matmul / f32-epilogue precision policy."""
    if id_per_sess is None:
        id_per_sess = list(range(len(params["out"])))
    out_idx = int(list(id_per_sess).index(sess_id)) if len(id_per_sess) > 1 else 0
    x = x.reshape(x.shape[0], -1)
    layers = [params["in_layer"]] + list(params["hidden"]) + [params["out"][out_idx]]
    h = x.astype(jnp.bfloat16)
    for i, (w, b) in enumerate(layers):
        z = jnp.dot(h, w.astype(jnp.bfloat16),
                    preferred_element_type=jnp.float32) + b.astype(jnp.float32)
        if i < len(layers) - 1:
            h = jnp.maximum(z, 0.0).astype(jnp.bfloat16)
        else:
            h = jax.nn.log_softmax(z, axis=-1) if softmax else z
    return h


if __name__ == "__main__":
    key = jax.random.PRNGKey(0)
    k_x, k_p, k_x2, k_p2 = jax.random.split(key, 4)

    # ---- Small-shape test (grid-less path): B=2, C=4, T=16 -> in_dim=64 ----
    B, C, T = 2, 4, 16
    in_dim = C * T
    hid_features = [32, 32]
    output_dim_per_session = [10, 12]
    id_per_sess = [0, 1]

    x = jax.random.normal(k_x, (B, C, T), dtype=jnp.float32)
    params = init_mlp_params(k_p, in_dim, hid_features, output_dim_per_session)
    prepared = prepare_mlp_params(params)          # pad/cast ONCE, reuse per call

    out0 = mlp_forward(prepared, x, sess_id=0, id_per_sess=id_per_sess, softmax=False)
    out1 = mlp_forward(prepared, x, sess_id=1, id_per_sess=id_per_sess, softmax=True)
    jax.block_until_ready(out0)
    jax.block_until_ready(out1)

    assert out0.shape == (B, output_dim_per_session[0])
    assert out1.shape == (B, output_dim_per_session[1])

    # Tight check against the bf16-policy reference (same precision policy).
    refb0 = mlp_forward_ref_bf16(params, x, 0, id_per_sess, softmax=False)
    refb1 = mlp_forward_ref_bf16(params, x, 1, id_per_sess, softmax=True)
    assert jnp.allclose(out0, refb0, atol=5e-3, rtol=5e-3)
    assert jnp.allclose(out1, refb1, atol=5e-3, rtol=5e-3)

    # Looser check against the full-f32 spec reference (bf16 MXU rounding).
    ref0 = mlp_forward_ref(params, x, 0, id_per_sess, softmax=False)
    ref1 = mlp_forward_ref(params, x, 1, id_per_sess, softmax=True)
    assert jnp.allclose(out0, ref0, atol=5e-2, rtol=5e-2)
    assert jnp.allclose(out1, ref1, atol=5e-2, rtol=5e-2)

    # ---- Larger-batch test (gridded, megacore-parallel path) ----
    B2, in_dim2 = 1024, 256
    params2 = init_mlp_params(k_p2, in_dim2, [256], [128])
    prepared2 = prepare_mlp_params(params2)
    x2 = jax.random.normal(k_x2, (B2, in_dim2), dtype=jnp.float32)

    out2 = mlp_forward(prepared2, x2, sess_id=0, softmax=True)
    jax.block_until_ready(out2)
    assert out2.shape == (B2, 128)
    refb2 = mlp_forward_ref_bf16(params2, x2, 0, None, softmax=True)
    assert jnp.allclose(out2, refb2, atol=5e-3, rtol=5e-3)
    assert bool(jnp.all(jnp.isfinite(out2)))

    print("KERNEL_OK")
</pallas_src>

<mosaic_0001>
module attributes {stable_mosaic.version = 11 : i64} {
  func.func @_mlp_kernel(%arg0: memref<8x128xbf16, #tpu.memory_space<vmem>>, %arg1: memref<128x128xbf16, #tpu.memory_space<vmem>>, %arg2: memref<1x128xf32, #tpu.memory_space<vmem>>, %arg3: memref<128x128xbf16, #tpu.memory_space<vmem>>, %arg4: memref<1x128xf32, #tpu.memory_space<vmem>>, %arg5: memref<128x128xbf16, #tpu.memory_space<vmem>>, %arg6: memref<1x128xf32, #tpu.memory_space<vmem>>, %arg7: memref<8x128xf32, #tpu.memory_space<vmem>>) attributes {dimension_semantics = [], scalar_prefetch = 0 : i64, scratch_operands = 0 : i64, tpu.core_type = #tpu.core_type<tc>} {
    %c0 = arith.constant 0 : index
    %c0_0 = arith.constant 0 : index
    %0 = vector.load %arg0[%c0, %c0_0] : memref<8x128xbf16, #tpu.memory_space<vmem>>, vector<8x128xbf16>
    %c0_1 = arith.constant 0 : index
    %c0_2 = arith.constant 0 : index
    %1 = vector.load %arg1[%c0_1, %c0_2] : memref<128x128xbf16, #tpu.memory_space<vmem>>, vector<128x128xbf16>
    %c0_3 = arith.constant 0 : index
    %c0_4 = arith.constant 0 : index
    %2 = vector.load %arg2[%c0_3, %c0_4] : memref<1x128xf32, #tpu.memory_space<vmem>>, vector<1x128xf32>
    %cst = arith.constant dense<0.000000e+00> : vector<8x128xf32>
    %3 = tpu.matmul %0, %1, %cst {dimension_numbers = #tpu.dot_dimension_numbers<[1], [0], [0], [1], [0, 0, 1, 1], [], []>} : vector<8x128xbf16>, vector<128x128xbf16>, vector<8x128xf32> -> vector<8x128xf32>
    %4 = vector.broadcast %2 : vector<1x128xf32> to vector<8x128xf32>
    %5 = arith.addf %3, %4 : vector<8x128xf32>
    %cst_5 = arith.constant 0.000000e+00 : f32
    %6 = vector.broadcast %cst_5 : f32 to vector<8x128xf32>
    %7 = arith.maximumf %5, %6 : vector<8x128xf32>
    %8 = arith.truncf %7 : vector<8x128xf32> to vector<8x128xbf16>
    %c0_6 = arith.constant 0 : index
    %c0_7 = arith.constant 0 : index
    %9 = vector.load %arg3[%c0_6, %c0_7] : memref<128x128xbf16, #tpu.memory_space<vmem>>, vector<128x128xbf16>
    %c0_8 = arith.constant 0 : index
    %c0_9 = arith.constant 0 : index
    %10 = vector.load %arg4[%c0_8, %c0_9] : memref<1x128xf32, #tpu.memory_space<vmem>>, vector<1x128xf32>
    %cst_10 = arith.constant dense<0.000000e+00> : vector<8x128xf32>
    %11 = tpu.matmul %8, %9, %cst_10 {dimension_numbers = #tpu.dot_dimension_numbers<[1], [0], [0], [1], [0, 0, 1, 1], [], []>} : vector<8x128xbf16>, vector<128x128xbf16>, vector<8x128xf32> -> vector<8x128xf32>
    %12 = vector.broadcast %10 : vector<1x128xf32> to vector<8x128xf32>
    %13 = arith.addf %11, %12 : vector<8x128xf32>
    %cst_11 = arith.constant 0.000000e+00 : f32
    %14 = vector.broadcast %cst_11 : f32 to vector<8x128xf32>
    %15 = arith.maximumf %13, %14 : vector<8x128xf32>
    %16 = arith.truncf %15 : vector<8x128xf32> to vector<8x128xbf16>
    %c0_12 = arith.constant 0 : index
    %c0_13 = arith.constant 0 : index
    %17 = vector.load %arg5[%c0_12, %c0_13] : memref<128x128xbf16, #tpu.memory_space<vmem>>, vector<128x128xbf16>
    %c0_14 = arith.constant 0 : index
    %c0_15 = arith.constant 0 : index
    %18 = vector.load %arg6[%c0_14, %c0_15] : memref<1x128xf32, #tpu.memory_space<vmem>>, vector<1x128xf32>
    %cst_16 = arith.constant dense<0.000000e+00> : vector<8x128xf32>
    %19 = tpu.matmul %16, %17, %cst_16 {dimension_numbers = #tpu.dot_dimension_numbers<[1], [0], [0], [1], [0, 0, 1, 1], [], []>} : vector<8x128xbf16>, vector<128x128xbf16>, vector<8x128xf32> -> vector<8x128xf32>
    %20 = vector.broadcast %18 : vector<1x128xf32> to vector<8x128xf32>
    %21 = arith.addf %19, %20 : vector<8x128xf32>
    %c0_17 = arith.constant 0 : index
    %c0_18 = arith.constant 0 : index
    %22 = vector.load %arg7[%c0_17, %c0_18] : memref<8x128xf32, #tpu.memory_space<vmem>>, vector<8x128xf32>
    tpu.vector_store %arg7[%c0_17, %c0_18], %21 {strides = array<i32>} : memref<8x128xf32, #tpu.memory_space<vmem>>, vector<8x128xf32>,
    return
  }
}

</mosaic_0001>

<llo_original>
// kernel: tpu_custom_call.1
$region0: #{tpu_custom_call.1}
  #allocation0 [shape = 'u32[]', space=smem, size = 0x4, offset = 0x4, fixed_abs, tag = 'smem constant byte address 0x4 - core index']
  #allocation1 [shape = 'u32[144,128]{1,0:T(1,128)}', space=vmem, size = 0x12000, scoped, tag = 'internal scratch']
  %s0 = inlined_call_operand.hbm [shape: bf16[8,128], index: 0, kind: input, shape index: {}]
  %s1 = inlined_call_operand.hbm [shape: bf16[128,128], index: 1, kind: input, shape index: {}]
  %s2 = inlined_call_operand.vmem [shape: f32[1,128], index: 2, kind: input, shape index: {}]
  %s3 = inlined_call_operand.hbm [shape: bf16[128,128], index: 3, kind: input, shape index: {}]
  %s4 = inlined_call_operand.vmem [shape: f32[1,128], index: 4, kind: input, shape index: {}]
  %s5 = inlined_call_operand.hbm [shape: bf16[128,128], index: 5, kind: input, shape index: {}]
  %s6 = inlined_call_operand.vmem [shape: f32[1,128], index: 6, kind: input, shape index: {}]
  %s7 = inlined_call_operand.hbm [shape: f32[8,128], index: 7, kind: output, shape index: {}]
  %s8 = sld [smem:[#allocation0]]
  $region54: #{tpu_custom_call.1} parent=0
    _
  %s10 = ssub.s32 1, %s8
  %s11 = scalar_select 0, %s10, %s8
  $region1: #{tpu_custom_call.1} parent=0
    #allocation2 [shape = 'u8[2048]{0}', space=vmem, size = 0x800, scoped, tag = 'input window, operand 0, single buffered']
    #allocation3 [shape = 's32[1]{0}', space=sflag, size = 0x4, scoped, tag = 'scoped memory for tpu_custom_call.1']
    #allocation4 [shape = 's32[1]{0}', space=sflag, size = 0x4, scoped, tag = 'scoped memory for tpu_custom_call.1']
    #allocation5 [shape = 'u8[32768]{0}', space=vmem, size = 0x8000, scoped, tag = 'input window, operand 1, single buffered']
    #allocation6 [shape = 's32[1]{0}', space=sflag, size = 0x4, scoped, tag = 'scoped memory for tpu_custom_call.1']
    #allocation7 [shape = 'u8[32768]{0}', space=vmem, size = 0x8000, scoped, tag = 'input window, operand 3, single buffered']
    #allocation8 [shape = 'u8[32768]{0}', space=vmem, size = 0x8000, scoped, tag = 'input window, operand 5, single buffered']
    #allocation9 [shape = 's32[1]{0}', space=sflag, size = 0x4, scoped, tag = 'scoped memory for tpu_custom_call.1']
    #allocation10 [shape = 'u8[4096]{0}', space=vmem, size = 0x1000, scoped, tag = 'output window, operand 0, single buffered']
    %12 = vsyncpa [#allocation3], 0
    %13 = vsyncpa [#allocation6], 0
    %14 = vsyncpa [#allocation9], 0
    %15 = vsyncpa [#allocation4], 0
    // Predicated region
    $region2: #{tpu_custom_call.1} parent=1 // pred_check
      _
    $region3: #{tpu_custom_call.1} parent=1 // pred_check_branch
      %17 = sbr.rel (0) target = $region5
    $region4: #{tpu_custom_call.1} parent=1 // pred_region
      %s19 = ssub.s32 64, 64
      %20 = vsyncadd [#allocation3], %s19
      %s22 = sshll.u32 [#allocation2], 4
      %s23 = int_to_ptr.vmem [resolvable:$true] %s22
      %25 = dma.hbm_to_vmem [thread:$0]  %s0, 64, %s23, [#allocation3]
    $region5: #{tpu_custom_call.1} parent=1 // pred_fallthru
      _
    // Predicated region
    $region6: #{tpu_custom_call.1} parent=1 // pred_check
      _
    $region7: #{tpu_custom_call.1} parent=1 // pred_check_branch
      %27 = sbr.rel (0) target = $region9
    $region8: #{tpu_custom_call.1} parent=1 // pred_region
      %s29 = ssub.s32 1024, 1024
      %30 = vsyncadd [#allocation6], %s29
      %s31 = sshll.u32 [#allocation5], 4
      %s32 = int_to_ptr.vmem [resolvable:$true] %s31
      %37 = dma.hbm_to_vmem [thread:$0]  %s1, 1024, %s32, [#allocation6], 64, 64, 4
    $region9: #{tpu_custom_call.1} parent=1 // pred_fallthru
      _
    // Predicated region
    $region10: #{tpu_custom_call.1} parent=1 // pred_check
      _
    $region11: #{tpu_custom_call.1} parent=1 // pred_check_branch
      %39 = sbr.rel (0) target = $region13
    $region12: #{tpu_custom_call.1} parent=1 // pred_region
      _
    $region13: #{tpu_custom_call.1} parent=1 // pred_fallthru
      _
    // Predicated region
    $region14: #{tpu_custom_call.1} parent=1 // pred_check
      _
    $region15: #{tpu_custom_call.1} parent=1 // pred_check_branch
      %41 = sbr.rel (0) target = $region17
    $region16: #{tpu_custom_call.1} parent=1 // pred_region
      %s43 = ssub.s32 1024, 1024
      %44 = vsyncadd [#allocation6], %s43
      %s45 = sshll.u32 [#allocation7], 4
      %s46 = int_to_ptr.vmem [resolvable:$true] %s45
      %51 = dma.hbm_to_vmem [thread:$0]  %s3, 1024, %s46, [#allocation6], 64, 64, 4
    $region17: #{tpu_custom_call.1} parent=1 // pred_fallthru
      _
    // Predicated region
    $region18: #{tpu_custom_call.1} parent=1 // pred_check
      _
    $region19: #{tpu_custom_call.1} parent=1 // pred_check_branch
      %53 = sbr.rel (0) target = $region21
    $region20: #{tpu_custom_call.1} parent=1 // pred_region
      _
    $region21: #{tpu_custom_call.1} parent=1 // pred_fallthru
      _
    // Predicated region
    $region22: #{tpu_custom_call.1} parent=1 // pred_check
      _
    $region23: #{tpu_custom_call.1} parent=1 // pred_check_branch
      %55 = sbr.rel (0) target = $region25
    $region24: #{tpu_custom_call.1} parent=1 // pred_region
      %s57 = ssub.s32 1024, 1024
      %58 = vsyncadd [#allocation9], %s57
      %s59 = sshll.u32 [#allocation8], 4
      %s60 = int_to_ptr.vmem [resolvable:$true] %s59
      %65 = dma.hbm_to_vmem [thread:$0]  %s5, 1024, %s60, [#allocation9], 64, 64, 4
    $region25: #{tpu_custom_call.1} parent=1 // pred_fallthru
      _
    // Predicated region
    $region26: #{tpu_custom_call.1} parent=1 // pred_check
      _
    $region27: #{tpu_custom_call.1} parent=1 // pred_check_branch
      %67 = sbr.rel (0) target = $region29
    $region28: #{tpu_custom_call.1} parent=1 // pred_region
      _
    $region29: #{tpu_custom_call.1} parent=1 // pred_fallthru
      _
    // Predicated region
    $region30: #{tpu_custom_call.1} parent=1 // pred_check
      _
    $region31: #{tpu_custom_call.1} parent=1 // pred_check_branch
      %69 = sbr.rel (0) target = $region33
    $region32: #{tpu_custom_call.1} parent=1 // pred_region
      %70 = dma.done [#allocation3], 64
    $region33: #{tpu_custom_call.1} parent=1 // pred_fallthru
      _
    // Predicated region
    $region34: #{tpu_custom_call.1} parent=1 // pred_check
      _
    $region35: #{tpu_custom_call.1} parent=1 // pred_check_branch
      %72 = sbr.rel (0) target = $region37
    $region36: #{tpu_custom_call.1} parent=1 // pred_region
      %73 = dma.done [#allocation6], 1024
    $region37: #{tpu_custom_call.1} parent=1 // pred_fallthru
      _
    // Predicated region
    $region38: #{tpu_custom_call.1} parent=1 // pred_check
      _
    $region39: #{tpu_custom_call.1} parent=1 // pred_check_branch
      %75 = sbr.rel (0) target = $region41
    $region40: #{tpu_custom_call.1} parent=1 // pred_region
      %76 = dma.done [#allocation6], 1024
    $region41: #{tpu_custom_call.1} parent=1 // pred_fallthru
      _
    // Predicated region
    $region42: #{tpu_custom_call.1} parent=1 // pred_check
      _
    $region43: #{tpu_custom_call.1} parent=1 // pred_check_branch
      %78 = sbr.rel (0) target = $region45
    $region44: #{tpu_custom_call.1} parent=1 // pred_region
      %79 = dma.done [#allocation9], 1024
    $region45: #{tpu_custom_call.1} parent=1 // pred_fallthru
      _
    %v81 = vld [vmem:[#allocation2] sm:$0xf]
    %v82 = vld [vmem:[#allocation5] sm:$0xf]
    %v83 = vld [vmem:[#allocation5 + $0x4] sm:$0xf]
    %v84 = vld [vmem:[#allocation5 + $0x8] sm:$0xf]
    %v85 = vld [vmem:[#allocation5 + $0xc] sm:$0xf]
    %v86 = vld [vmem:[#allocation5 + $0x10] sm:$0xf]
    %v87 = vld [vmem:[#allocation5 + $0x14] sm:$0xf]
    %v88 = vld [vmem:[#allocation5 + $0x18] sm:$0xf]
    %v89 = vld [vmem:[#allocation5 + $0x1c] sm:$0xf]
    %v90 = vld [vmem:[#allocation5 + $0x20] sm:$0xf]
    %v91 = vld [vmem:[#allocation5 + $0x24] sm:$0xf]
    %v92 = vld [vmem:[#allocation5 + $0x28] sm:$0xf]
    %v93 = vld [vmem:[#allocation5 + $0x2c] sm:$0xf]
    %v94 = vld [vmem:[#allocation5 + $0x30] sm:$0xf]
    %v95 = vld [vmem:[#allocation5 + $0x34] sm:$0xf]
    %v96 = vld [vmem:[#allocation5 + $0x38] sm:$0xf]
    %v97 = vld [vmem:[#allocation5 + $0x3c] sm:$0xf]
    %v98 = vld [vmem:[%s2] sm:$0x1]
    %v100 = vlaneseq
    %v101 = vshrl.u32 %v100, 7
    %v102 = vsub.s32 0, %v101
    %v103 = vrot.slane %v98, %v102
    %v121 = vunpack.c.l.b16 %v82
    %v122 = vunpack.c.l.b16 %v83
    %v123 = vunpack.c.l.b16 %v84
    %v124 = vunpack.c.l.b16 %v85
    %v125 = vunpack.c.l.b16 %v86
    %v126 = vunpack.c.l.b16 %v87
    %v127 = vunpack.c.l.b16 %v88
    %v128 = vunpack.c.l.b16 %v89
    %v129 = vunpack.c.l.b16 %v90
    %v130 = vunpack.c.l.b16 %v91
    %v131 = vunpack.c.l.b16 %v92
    %v132 = vunpack.c.l.b16 %v93
    %v133 = vunpack.c.l.b16 %v94
    %v134 = vunpack.c.l.b16 %v95
    %v135 = vunpack.c.l.b16 %v96
    %v136 = vunpack.c.l.b16 %v97
    %v137 = vpack.c.b16 %v122, %v121
    %v138 = vpack.c.b16 %v124, %v123
    %v139 = vpack.c.b16 %v126, %v125
    %v140 = vpack.c.b16 %v128, %v127
    %v141 = vpack.c.b16 %v130, %v129
    %v142 = vpack.c.b16 %v132, %v131
    %v143 = vpack.c.b16 %v134, %v133
    %v144 = vpack.c.b16 %v136, %v135
    %153 = vmatprep.subr.bf16.mxu0 0
    %154 = vmatpush1.bf16.msra.mxu0 %v137
    %155 = vmatprep.subr.bf16.mxu0 0
    %156 = vmatpush1.bf16.msra.mxu0 %v138
    %157 = vmatprep.subr.bf16.mxu0 0
    %158 = vmatpush1.bf16.msra.mxu0 %v139
    %159 = vmatprep.subr.bf16.mxu0 0
    %160 = vmatpush1.bf16.msra.mxu0 %v140
    %161 = vmatprep.subr.bf16.mxu0 0
    %162 = vmatpush1.bf16.msra.mxu0 %v141
    %163 = vmatprep.subr.bf16.mxu0 0
    %164 = vmatpush1.bf16.msra.mxu0 %v142
    %165 = vmatprep.subr.bf16.mxu0 0
    %166 = vmatpush1.bf16.msra.mxu0 %v143
    %167 = vmatprep.subr.bf16.mxu0 0
    %168 = vmatpush1.bf16.msra.mxu0 %v144
    %169 = vmatprep.subr.bf16.mxu0 0
    %170 = vmatpush1.bf16.msra.mxu0 0
    %171 = vmatprep.subr.bf16.mxu0 0
    %172 = vmatpush1.bf16.msra.mxu0 0
    %173 = vmatprep.subr.bf16.mxu0 0
    %174 = vmatpush1.bf16.msra.mxu0 0
    %175 = vmatprep.subr.bf16.mxu0 0
    %176 = vmatpush1.bf16.msra.mxu0 0
    %177 = vmatprep.subr.bf16.mxu0 0
    %178 = vmatpush1.bf16.msra.mxu0 0
    %179 = vmatprep.subr.bf16.mxu0 0
    %180 = vmatpush1.bf16.msra.mxu0 0
    %181 = vmatprep.subr.bf16.mxu0 0
    %182 = vmatpush1.bf16.msra.mxu0 0
    %183 = vmatprep.subr.bf16.mxu0 0
    %184 = vmatpush1.bf16.msra.mxu0 0
    %185 = vmatprep.mubr.bf16.mxu0 0
    %186 = vmatmul.mubr.bf16.gmra.mrb[0].mxu0 %v81
    %v187 = vpop.f32.mrb[0].mxu0
    %v188 = vadd.f32 %v103, %v187
    %v189 = vpop.f32.mrb[0].mxu0
    %v190 = vpop.f32.mrb[0].mxu0
    %v191 = vpop.f32.mrb[0].mxu0
    %192 = vdwg.mxu0
    %v193 = vmax.f32 %v188, 0.0
    %v194 = vpack.c.bf16 %v193, %v193
    %v195 = vld [vmem:[#allocation7] sm:$0xf]
    %v196 = vld [vmem:[#allocation7 + $0x4] sm:$0xf]
    %v197 = vld [vmem:[#allocation7 + $0x8] sm:$0xf]
    %v198 = vld [vmem:[#allocation7 + $0xc] sm:$0xf]
    %v199 = vld [vmem:[#allocation7 + $0x10] sm:$0xf]
    %v200 = vld [vmem:[#allocation7 + $0x14] sm:$0xf]
    %v201 = vld [vmem:[#allocation7 + $0x18] sm:$0xf]
    %v202 = vld [vmem:[#allocation7 + $0x1c] sm:$0xf]
    %v203 = vld [vmem:[#allocation7 + $0x20] sm:$0xf]
    %v204 = vld [vmem:[#allocation7 + $0x24] sm:$0xf]
    %v205 = vld [vmem:[#allocation7 + $0x28] sm:$0xf]
    %v206 = vld [vmem:[#allocation7 + $0x2c] sm:$0xf]
    %v207 = vld [vmem:[#allocation7 + $0x30] sm:$0xf]
    %v208 = vld [vmem:[#allocation7 + $0x34] sm:$0xf]
    %v209 = vld [vmem:[#allocation7 + $0x38] sm:$0xf]
    %v210 = vld [vmem:[#allocation7 + $0x3c] sm:$0xf]
    %v211 = vld [vmem:[%s4] sm:$0x1]
    %v213 = vlaneseq
    %v214 = vshrl.u32 %v213, 7
    %v215 = vsub.s32 0, %v214
    %v216 = vrot.slane %v211, %v215
    %v234 = vunpack.c.l.b16 %v195
    %v235 = vunpack.c.l.b16 %v196
    %v236 = vunpack.c.l.b16 %v197
    %v237 = vunpack.c.l.b16 %v198
    %v238 = vunpack.c.l.b16 %v199
    %v239 = vunpack.c.l.b16 %v200
    %v240 = vunpack.c.l.b16 %v201
    %v241 = vunpack.c.l.b16 %v202
    %v242 = vunpack.c.l.b16 %v203
    %v243 = vunpack.c.l.b16 %v204
    %v244 = vunpack.c.l.b16 %v205
    %v245 = vunpack.c.l.b16 %v206
    %v246 = vunpack.c.l.b16 %v207
    %v247 = vunpack.c.l.b16 %v208
    %v248 = vunpack.c.l.b16 %v209
    %v249 = vunpack.c.l.b16 %v210
    %v250 = vpack.c.b16 %v235, %v234
    %v251 = vpack.c.b16 %v237, %v236
    %v252 = vpack.c.b16 %v239, %v238
    %v253 = vpack.c.b16 %v241, %v240
    %v254 = vpack.c.b16 %v243, %v242
    %v255 = vpack.c.b16 %v245, %v244
    %v256 = vpack.c.b16 %v247, %v246
    %v257 = vpack.c.b16 %v249, %v248
    %266 = vmatprep.subr.bf16.mxu0 0
    %267 = vmatpush1.bf16.msra.mxu0 %v250
    %268 = vmatprep.subr.bf16.mxu0 0
    %269 = vmatpush1.bf16.msra.mxu0 %v251
    %270 = vmatprep.subr.bf16.mxu0 0
    %271 = vmatpush1.bf16.msra.mxu0 %v252
    %272 = vmatprep.subr.bf16.mxu0 0
    %273 = vmatpush1.bf16.msra.mxu0 %v253
    %274 = vmatprep.subr.bf16.mxu0 0
    %275 = vmatpush1.bf16.msra.mxu0 %v254
    %276 = vmatprep.subr.bf16.mxu0 0
    %277 = vmatpush1.bf16.msra.mxu0 %v255
    %278 = vmatprep.subr.bf16.mxu0 0
    %279 = vmatpush1.bf16.msra.mxu0 %v256
    %280 = vmatprep.subr.bf16.mxu0 0
    %281 = vmatpush1.bf16.msra.mxu0 %v257
    %282 = vmatprep.subr.bf16.mxu0 0
    %283 = vmatpush1.bf16.msra.mxu0 0
    %284 = vmatprep.subr.bf16.mxu0 0
    %285 = vmatpush1.bf16.msra.mxu0 0
    %286 = vmatprep.subr.bf16.mxu0 0
    %287 = vmatpush1.bf16.msra.mxu0 0
    %288 = vmatprep.subr.bf16.mxu0 0
    %289 = vmatpush1.bf16.msra.mxu0 0
    %290 = vmatprep.subr.bf16.mxu0 0
    %291 = vmatpush1.bf16.msra.mxu0 0
    %292 = vmatprep.subr.bf16.mxu0 0
    %293 = vmatpush1.bf16.msra.mxu0 0
    %294 = vmatprep.subr.bf16.mxu0 0
    %295 = vmatpush1.bf16.msra.mxu0 0
    %296 = vmatprep.subr.bf16.mxu0 0
    %297 = vmatpush1.bf16.msra.mxu0 0
    %298 = vmatprep.mubr.bf16.mxu0 0
    %299 = vmatmul.mubr.bf16.gmra.mrb[0].mxu0 %v194
    %v300 = vpop.f32.mrb[0].mxu0
    %v301 = vadd.f32 %v216, %v300
    %v302 = vpop.f32.mrb[0].mxu0
    %v303 = vpop.f32.mrb[0].mxu0
    %v304 = vpop.f32.mrb[0].mxu0
    %305 = vdwg.mxu0
    %v306 = vmax.f32 %v301, 0.0
    %v307 = vpack.c.bf16 %v306, %v306
    %v308 = vld [vmem:[#allocation8] sm:$0xf]
    %v309 = vld [vmem:[#allocation8 + $0x4] sm:$0xf]
    %v310 = vld [vmem:[#allocation8 + $0x8] sm:$0xf]
    %v311 = vld [vmem:[#allocation8 + $0xc] sm:$0xf]
    %v312 = vld [vmem:[#allocation8 + $0x10] sm:$0xf]
    %v313 = vld [vmem:[#allocation8 + $0x14] sm:$0xf]
    %v314 = vld [vmem:[#allocation8 + $0x18] sm:$0xf]
    %v315 = vld [vmem:[#allocation8 + $0x1c] sm:$0xf]
    %v316 = vld [vmem:[#allocation8 + $0x20] sm:$0xf]
    %v317 = vld [vmem:[#allocation8 + $0x24] sm:$0xf]
    %v318 = vld [vmem:[#allocation8 + $0x28] sm:$0xf]
    %v319 = vld [vmem:[#allocation8 + $0x2c] sm:$0xf]
    %v320 = vld [vmem:[#allocation8 + $0x30] sm:$0xf]
    %v321 = vld [vmem:[#allocation8 + $0x34] sm:$0xf]
    %v322 = vld [vmem:[#allocation8 + $0x38] sm:$0xf]
    %v323 = vld [vmem:[#allocation8 + $0x3c] sm:$0xf]
    %v324 = vld [vmem:[%s6] sm:$0x1]
    %v326 = vlaneseq
    %v327 = vshrl.u32 %v326, 7
    %v328 = vsub.s32 0, %v327
    %v329 = vrot.slane %v324, %v328
    %v347 = vunpack.c.l.b16 %v308
    %v348 = vunpack.c.l.b16 %v309
    %v349 = vunpack.c.l.b16 %v310
    %v350 = vunpack.c.l.b16 %v311
    %v351 = vunpack.c.l.b16 %v312
    %v352 = vunpack.c.l.b16 %v313
    %v353 = vunpack.c.l.b16 %v314
    %v354 = vunpack.c.l.b16 %v315
    %v355 = vunpack.c.l.b16 %v316
    %v356 = vunpack.c.l.b16 %v317
    %v357 = vunpack.c.l.b16 %v318
    %v358 = vunpack.c.l.b16 %v319
    %v359 = vunpack.c.l.b16 %v320
    %v360 = vunpack.c.l.b16 %v321
    %v361 = vunpack.c.l.b16 %v322
    %v362 = vunpack.c.l.b16 %v323
    %v363 = vpack.c.b16 %v348, %v347
    %v364 = vpack.c.b16 %v350, %v349
    %v365 = vpack.c.b16 %v352, %v351
    %v366 = vpack.c.b16 %v354, %v353
    %v367 = vpack.c.b16 %v356, %v355
    %v368 = vpack.c.b16 %v358, %v357
    %v369 = vpack.c.b16 %v360, %v359
    %v370 = vpack.c.b16 %v362, %v361
    %379 = vmatprep.subr.bf16.mxu0 0
    %380 = vmatpush1.bf16.msra.mxu0 %v363
    %381 = vmatprep.subr.bf16.mxu0 0
    %382 = vmatpush1.bf16.msra.mxu0 %v364
    %383 = vmatprep.subr.bf16.mxu0 0
    %384 = vmatpush1.bf16.msra.mxu0 %v365
    %385 = vmatprep.subr.bf16.mxu0 0
    %386 = vmatpush1.bf16.msra.mxu0 %v366
    %387 = vmatprep.subr.bf16.mxu0 0
    %388 = vmatpush1.bf16.msra.mxu0 %v367
    %389 = vmatprep.subr.bf16.mxu0 0
    %390 = vmatpush1.bf16.msra.mxu0 %v368
    %391 = vmatprep.subr.bf16.mxu0 0
    %392 = vmatpush1.bf16.msra.mxu0 %v369
    %393 = vmatprep.subr.bf16.mxu0 0
    %394 = vmatpush1.bf16.msra.mxu0 %v370
    %395 = vmatprep.subr.bf16.mxu0 0
    %396 = vmatpush1.bf16.msra.mxu0 0
    %397 = vmatprep.subr.bf16.mxu0 0
    %398 = vmatpush1.bf16.msra.mxu0 0
    %399 = vmatprep.subr.bf16.mxu0 0
    %400 = vmatpush1.bf16.msra.mxu0 0
    %401 = vmatprep.subr.bf16.mxu0 0
    %402 = vmatpush1.bf16.msra.mxu0 0
    %403 = vmatprep.subr.bf16.mxu0 0
    %404 = vmatpush1.bf16.msra.mxu0 0
    %405 = vmatprep.subr.bf16.mxu0 0
    %406 = vmatpush1.bf16.msra.mxu0 0
    %407 = vmatprep.subr.bf16.mxu0 0
    %408 = vmatpush1.bf16.msra.mxu0 0
    %409 = vmatprep.subr.bf16.mxu0 0
    %410 = vmatpush1.bf16.msra.mxu0 0
    %411 = vmatprep.mubr.bf16.mxu0 0
    %412 = vmatmul.mubr.bf16.gmra.mrb[0].mxu0 %v307
    %v413 = vpop.f32.mrb[0].mxu0
    %v414 = vadd.f32 %v329, %v413
    %v415 = vpop.f32.mrb[0].mxu0
    %v416 = vpop.f32.mrb[0].mxu0
    %v417 = vpop.f32.mrb[0].mxu0
    %418 = vdwg.mxu0
    %419 = vst [vmem:[#allocation10] sm:$0xff] %v414
    // Predicated region
    $region46: #{tpu_custom_call.1} parent=1 // pred_check
      _
    $region47: #{tpu_custom_call.1} parent=1 // pred_check_branch
      %421 = sbr.rel (0) target = $region49
    $region48: #{tpu_custom_call.1} parent=1 // pred_region
      %s423 = ssub.s32 128, 128
      %424 = vsyncadd [#allocation4], %s423
      %s426 = sshll.u32 [#allocation10], 4
      %s427 = int_to_ptr.vmem [resolvable:$true] %s426
      %429 = dma.vmem_to_hbm [thread:$0]  %s427, 128, %s7, [#allocation4]
    $region49: #{tpu_custom_call.1} parent=1 // pred_fallthru
      _
    // Predicated region
    $region50: #{tpu_custom_call.1} parent=1 // pred_check
      _
    $region51: #{tpu_custom_call.1} parent=1 // pred_check_branch
      %431 = sbr.rel (0) target = $region53
    $region52: #{tpu_custom_call.1} parent=1 // pred_region
      %432 = dma.done [#allocation4], 128
    $region53: #{tpu_custom_call.1} parent=1 // pred_fallthru
      _
    %433 = vsyncpa [#allocation3], 1
    %434 = vsyncpa [#allocation6], 1
    %435 = vsyncpa [#allocation9], 1
    %436 = vsyncpa [#allocation4], 1

</llo_original>
